<compile_context>
chip_gen: v7x
topology: tpu7x:2x2x1
jax: 0.10.0
libtpu: 0.0.40
codegen_flags: <defaults>
</compile_context>

<pallas_src>
import math

import jax
import jax.numpy as jnp
from jax.experimental import pallas as pl
from jax.experimental.pallas import tpu as pltpu

LANE = 128
TARGET_BLOCK_BYTES = 4 * 1024 * 1024     # ~4 MiB input tile per grid step
VMEM_LIMIT_BYTES = 32 * 1024 * 1024      # explicit: 2*(in+out) double-buffered ~= 16 MiB


def _quant_fq_activ_kernel(params_ref, x_ref, o_ref):
    """Single-branch fake-quant over one (block_rows, 128) tile.

    params_ref: SMEM (3,) f32 -- [c0 = n/s, n = 2**b - 1, c1 = s/n] for the selected branch
    x_ref:      VMEM tile of the input (original dtype)
    o_ref:      VMEM tile of the output (original dtype)
    """
    c0 = params_ref[0]          # n / s          (folds the /s and *n)
    n = params_ref[1]           # 2**b - 1
    c1 = params_ref[2]          # s / n          (folds the /n and *s)

    x = x_ref[...].astype(jnp.float32)
    q = jnp.clip(x * c0, 0.0, n)          # == clamp(x / s, 0, 1) * n   (up to 1 ULP)
    deq = jnp.round(q) * c1               # round-half-to-even == torch.round
    # After the clamp and multiply by a finite c1, deq can only be NaN (never +/-inf),
    # so an isnan-only select matches torch.nan_to_num here.
    deq = jnp.where(jnp.isnan(deq), 0.0, deq)
    o_ref[...] = deq.astype(o_ref.dtype)


def _fq_jnp(x, c0, n, c1):
    """Plain-jnp fallback path (ragged <128-element tails, tiny arrays)."""
    xf = x.astype(jnp.float32)
    q = jnp.clip(xf * c0, 0.0, n)
    deq = jnp.round(q) * c1
    return jnp.where(jnp.isnan(deq), 0.0, deq).astype(x.dtype)


def _pick_block_rows(dtype, rows):
    """Dtype-aware block rows targeting ~TARGET_BLOCK_BYTES per input tile."""
    itemsize = jnp.dtype(dtype).itemsize
    target = TARGET_BLOCK_BYTES // (LANE * max(int(itemsize), 1))
    if target >= rows:
        return rows                       # full-array block ("block == full dim" exception)
    return max(8, (target // 32) * 32)    # keep sublane packing happy for f32/bf16/int8


def quant_fq_activ(x, scale_params, alpha_activ, bits):
    """Pallas implementation of QuantFQActiv.forward.

    x:            any-shape float array (elementwise op; NCHW in the PyTorch module)
    scale_params: (len(bits),) raw scale params (log-space, like the nn.Parameter)
    alpha_activ:  (len(bits),) branch logits (argmax picks the active branch)
    bits:         static list of bit-widths
    """
    # Host-side branch pre-selection: sw is one-hot, so reduce to 3 folded scalars.
    idx = jnp.argmax(alpha_activ)
    n_per_bit = jnp.asarray([float(2 ** b - 1) for b in bits], dtype=jnp.float32)
    s_sel = jnp.exp(scale_params.astype(jnp.float32))[idx]
    n_sel = n_per_bit[idx]
    c0 = n_sel / s_sel
    c1 = s_sel / n_sel
    params = jnp.stack([c0, n_sel, c1]).astype(jnp.float32)

    orig_shape = x.shape
    n_elems = int(math.prod(orig_shape)) if orig_shape else 1
    if n_elems == 0:
        return x

    flat = x.reshape(-1)                  # free view, no HBM copy
    aligned = (n_elems // LANE) * LANE
    rem = n_elems - aligned

    pieces = []
    if aligned:
        # Copy-free lane-dense view of the 128-aligned prefix.
        x2d = (flat if rem == 0 else flat[:aligned]).reshape(-1, LANE)
        rows = x2d.shape[0]
        block_rows = _pick_block_rows(x.dtype, rows)
        grid = (pl.cdiv(rows, block_rows),)

        out2d = pl.pallas_call(
            _quant_fq_activ_kernel,
            out_shape=jax.ShapeDtypeStruct(x2d.shape, x.dtype),
            grid=grid,
            in_specs=[
                # Untiled SMEM input: landed in SMEM once before the grid runs,
                # no per-step DMA (equivalent to scalar prefetch for this purpose).
                pl.BlockSpec(memory_space=pltpu.MemorySpace.SMEM),
                pl.BlockSpec((block_rows, LANE), lambda i: (i, 0)),
            ],
            out_specs=pl.BlockSpec((block_rows, LANE), lambda i: (i, 0)),
            compiler_params=pltpu.CompilerParams(
                dimension_semantics=("parallel",),
                vmem_limit_bytes=VMEM_LIMIT_BYTES,
            ),
        )(params, x2d)
        pieces.append(out2d.reshape(-1))

    if rem:
        # <128-element ragged tail: tiny plain-jnp epilogue (no whole-array pad/copy).
        pieces.append(_fq_jnp(flat[aligned:], c0, n_sel, c1))

    out = pieces[0] if len(pieces) == 1 else jnp.concatenate(pieces)
    return out.reshape(orig_shape)


def _reference(x, scale_params, alpha_activ, bits):
    """Pure-JAX reference mirroring the PyTorch forward, for sanity checks."""
    sw = jax.nn.one_hot(jnp.argmax(alpha_activ), len(bits), dtype=jnp.float32)
    xf = x.astype(jnp.float32)
    acc = jnp.zeros_like(xf)
    for i, bit in enumerate(bits):
        s = jnp.exp(scale_params[i])
        n = float(2 ** bit - 1)
        q = jnp.round(jnp.clip(xf / s, 0.0, 1.0) * n) / n
        acc = acc + jnp.nan_to_num(q * s) * sw[i]
    return acc.astype(x.dtype)


if __name__ == "__main__":
    key = jax.random.PRNGKey(0)
    # Small NCHW input, matching the PyTorch conv-activation layout.
    x = jax.random.normal(key, (2, 4, 16, 16), dtype=jnp.float32) * 3.0

    bits = [2, 4, 8]
    # Parameters initialized exactly as in QuantFQActiv.__init__ / FQActQuantization.__init__.
    alpha_activ = jnp.full((len(bits),), 0.01, dtype=jnp.float32)
    scale_params = jnp.full((len(bits),), math.log(6.0), dtype=jnp.float32)

    # 1) default branch (argmax of all-equal alphas -> branch 0, 2-bit)
    out = jax.block_until_ready(quant_fq_activ(x, scale_params, alpha_activ, bits))
    ref = _reference(x, scale_params, alpha_activ, bits)
    assert out.shape == x.shape and out.dtype == x.dtype
    assert jnp.allclose(out, ref, atol=1e-5, rtol=1e-5)

    # 2) non-default branch selection (8-bit) exercises the one-hot reduction.
    alpha2 = jnp.asarray([0.01, 0.02, 0.5], dtype=jnp.float32)
    out_b2 = jax.block_until_ready(quant_fq_activ(x, scale_params, alpha2, bits))
    ref_b2 = _reference(x, scale_params, alpha2, bits)
    assert jnp.allclose(out_b2, ref_b2, atol=1e-5, rtol=1e-5)

    # 3) ragged numel (3*5*7*11 = 1155): 128-aligned prefix through the kernel,
    #    3-element tail through the jnp epilogue.
    x2 = jax.random.normal(jax.random.PRNGKey(1), (3, 5, 7, 11), dtype=jnp.float32) * 3.0
    out2 = jax.block_until_ready(quant_fq_activ(x2, scale_params, alpha_activ, bits))
    ref2 = _reference(x2, scale_params, alpha_activ, bits)
    assert out2.shape == x2.shape and out2.dtype == x2.dtype
    assert jnp.allclose(out2, ref2, atol=1e-5, rtol=1e-5)

    # 4) bf16 input exercises the dtype-aware block sizing + in-kernel f32 compute.
    #    Compared against the same folded-constant math (divide-based reference can
    #    legitimately differ by a full quant step at exact half-integer boundaries).
    x3 = (jax.random.normal(jax.random.PRNGKey(2), (2, 4, 16, 16), dtype=jnp.float32) * 3.0
          ).astype(jnp.bfloat16)
    out3 = jax.block_until_ready(quant_fq_activ(x3, scale_params, alpha_activ, bits))
    s0 = jnp.exp(scale_params[0])
    ref3 = _fq_jnp(x3, 3.0 / s0, jnp.float32(3.0), s0 / 3.0)
    assert out3.shape == x3.shape and out3.dtype == jnp.bfloat16
    assert jnp.allclose(out3.astype(jnp.float32), ref3.astype(jnp.float32), atol=1e-2)

    print("KERNEL_OK")
</pallas_src>

<mosaic_0001>
module attributes {stable_mosaic.version = 11 : i64} {
  func.func @_quant_fq_activ_kernel(%arg0: i32, %arg1: memref<3xf32, #tpu.memory_space<smem>>, %arg2: memref<16x128xf32, #tpu.memory_space<vmem>>, %arg3: memref<16x128xf32, #tpu.memory_space<vmem>>) attributes {dimension_semantics = [#tpu.dimension_semantics<parallel>], iteration_bounds = array<i64: 1>, scalar_prefetch = 0 : i64, scratch_operands = 0 : i64, tpu.core_type = #tpu.core_type<tc>, window_params = [{transform_indices = @transform_0, window_bounds = array<i64: 3>}, {transform_indices = @transform_1, window_bounds = array<i64: 16, 128>}, {transform_indices = @transform_2, window_bounds = array<i64: 16, 128>}]} {
    %c0 = arith.constant 0 : index
    %0 = memref.load %arg1[%c0] : memref<3xf32, #tpu.memory_space<smem>>
    %c1 = arith.constant 1 : index
    %1 = memref.load %arg1[%c1] : memref<3xf32, #tpu.memory_space<smem>>
    %c2 = arith.constant 2 : index
    %2 = memref.load %arg1[%c2] : memref<3xf32, #tpu.memory_space<smem>>
    %c0_0 = arith.constant 0 : index
    %c0_1 = arith.constant 0 : index
    %3 = vector.load %arg2[%c0_0, %c0_1] : memref<16x128xf32, #tpu.memory_space<vmem>>, vector<16x128xf32>
    %4 = vector.broadcast %0 : f32 to vector<16x128xf32>
    %5 = arith.mulf %3, %4 : vector<16x128xf32>
    %cst = arith.constant 0.000000e+00 : f32
    %6 = vector.broadcast %cst : f32 to vector<16x128xf32>
    %7 = arith.maximumf %6, %5 : vector<16x128xf32>
    %8 = vector.broadcast %1 : f32 to vector<16x128xf32>
    %9 = arith.minimumf %8, %7 : vector<16x128xf32>
    %10 = math.roundeven %9 : vector<16x128xf32>
    %11 = vector.broadcast %2 : f32 to vector<16x128xf32>
    %12 = arith.mulf %10, %11 : vector<16x128xf32>
    %13 = arith.cmpf one, %12, %12 : vector<16x128xf32>
    %cst_2 = arith.constant 0.000000e+00 : f32
    %14 = vector.broadcast %cst_2 : f32 to vector<16x128xf32>
    %15 = arith.select %13, %14, %12 : vector<16x128xi1>, vector<16x128xf32>
    %c0_3 = arith.constant 0 : index
    %c0_4 = arith.constant 0 : index
    %16 = vector.load %arg3[%c0_3, %c0_4] : memref<16x128xf32, #tpu.memory_space<vmem>>, vector<16x128xf32>
    tpu.vector_store %arg3[%c0_3, %c0_4], %15 {strides = array<i32>} : memref<16x128xf32, #tpu.memory_space<vmem>>, vector<16x128xf32>,
    return
  }
  func.func @transform_0(%arg0: i32) -> i32 {
    %c0_i32 = arith.constant 0 : i32
    %c0_i32_0 = arith.constant 0 : i32
    return %c0_i32 : i32
  }
  func.func @transform_1(%arg0: i32) -> (i32, i32) {
    %c0_i32 = arith.constant 0 : i32
    %c0_i32_0 = arith.constant 0 : i32
    return %arg0, %c0_i32 : i32, i32
  }
  func.func @transform_2(%arg0: i32) -> (i32, i32) {
    %c0_i32 = arith.constant 0 : i32
    %c0_i32_0 = arith.constant 0 : i32
    return %arg0, %c0_i32 : i32, i32
  }
}

</mosaic_0001>

<llo_original>
// kernel: tpu_custom_call.1
$region0: #{tpu_custom_call.1}
  #allocation0 [shape = 'u32[]', space=smem, size = 0x4, offset = 0x4, fixed_abs, tag = 'smem constant byte address 0x4 - core index']
  #allocation1 [shape = 'u32[144,128]{1,0:T(1,128)}', space=vmem, size = 0x12000, scoped, tag = 'internal scratch']
  %s0 = inlined_call_operand.hbm [shape: f32[3], index: 0, kind: input, shape index: {}]
  %s1 = inlined_call_operand.hbm [shape: f32[16,128], index: 1, kind: input, shape index: {}]
  %s2 = inlined_call_operand.hbm [shape: f32[16,128], index: 2, kind: output, shape index: {}]
  %s3 = sld [smem:[#allocation0]]
  $region26: #{tpu_custom_call.1} parent=0
    _
  %s5 = ssub.s32 1, %s3
  %s6 = scalar_select 0, %s5, %s3
  $region1: #{tpu_custom_call.1} parent=0
    #allocation2 [shape = 'u8[512]{0}', space=smem, size = 0x200, scoped, tag = 'input window, operand 0, single buffered']
    #allocation3 [shape = 's32[1]{0}', space=sflag, size = 0x4, scoped, tag = 'scoped memory for tpu_custom_call.1']
    #allocation4 [shape = 's32[1]{0}', space=sflag, size = 0x4, scoped, tag = 'scoped memory for tpu_custom_call.1']
    #allocation5 [shape = 's32[1]{0}', space=sflag, size = 0x4, scoped, tag = 'scoped memory for tpu_custom_call.1']
    #allocation6 [shape = 'u8[8192]{0}', space=vmem, size = 0x2000, scoped, tag = 'input window, operand 1, single buffered']
    #allocation7 [shape = 'u8[8192]{0}', space=vmem, size = 0x2000, scoped, tag = 'output window, operand 0, single buffered']
    %7 = vsyncpa [#allocation5], 0
    %8 = vsyncpa [#allocation3], 0
    %9 = vsyncpa [#allocation4], 0
    // Predicated region
    $region2: #{tpu_custom_call.1} parent=1 // pred_check
      _
    $region3: #{tpu_custom_call.1} parent=1 // pred_check_branch
      %11 = sbr.rel (0) target = $region5
    $region4: #{tpu_custom_call.1} parent=1 // pred_region
      %s13 = ssub.s32 16, 16
      %14 = vsyncadd [#allocation5], %s13
      %17 = dma.hbm_to_smem %s0, 16, [#allocation2], [#allocation5]
    $region5: #{tpu_custom_call.1} parent=1 // pred_fallthru
      _
    // Predicated region
    $region6: #{tpu_custom_call.1} parent=1 // pred_check
      _
    $region7: #{tpu_custom_call.1} parent=1 // pred_check_branch
      %19 = sbr.rel (0) target = $region9
    $region8: #{tpu_custom_call.1} parent=1 // pred_region
      %s21 = ssub.s32 256, 256
      %22 = vsyncadd [#allocation3], %s21
      %s23 = sshll.u32 [#allocation6], 4
      %s24 = int_to_ptr.vmem [resolvable:$true] %s23
      %29 = dma.hbm_to_vmem [thread:$0]  %s1, 256, %s24, [#allocation3], 128, 128, 8
    $region9: #{tpu_custom_call.1} parent=1 // pred_fallthru
      _
    // Predicated region
    $region10: #{tpu_custom_call.1} parent=1 // pred_check
      _
    $region11: #{tpu_custom_call.1} parent=1 // pred_check_branch
      %31 = sbr.rel (0) target = $region13
    $region12: #{tpu_custom_call.1} parent=1 // pred_region
      %32 = dma.done [#allocation5], 16
    $region13: #{tpu_custom_call.1} parent=1 // pred_fallthru
      _
    // Predicated region
    $region14: #{tpu_custom_call.1} parent=1 // pred_check
      _
    $region15: #{tpu_custom_call.1} parent=1 // pred_check_branch
      %34 = sbr.rel (0) target = $region17
    $region16: #{tpu_custom_call.1} parent=1 // pred_region
      %35 = dma.done [#allocation3], 256
    $region17: #{tpu_custom_call.1} parent=1 // pred_fallthru
      _
    %36 = sfence
    %s37 = sld [smem:[#allocation2]]
    %s38 = sld [smem:[#allocation2 + $0x1]]
    %s39 = sld [smem:[#allocation2 + $0x2]]
    %v40 = vld [vmem:[#allocation6] sm:$0xff]
    %v41 = vld [vmem:[#allocation6 + $0x8] sm:$0xff]
    %v42 = vstv %s37
    %v43 = vmul.f32 %v40, %v42
    %v44 = vmul.f32 %v41, %v42
    %v45 = vmax.f32 %v43, 0.0
    %v46 = vmax.f32 %v44, 0.0
    %v47 = vstv %s38
    %v48 = vmin.f32 %v47, %v45
    %v49 = vmin.f32 %v47, %v46
    %v50 = vround.ne.pseudo %v48
    %v51 = vround.ne.pseudo %v49
    %v52 = vstv %s39
    %v53 = vmul.f32 %v50, %v52
    %v54 = vmul.f32 %v51, %v52
    %vm55 = vcmp.ne.f32.partialorder %v53, %v53
    %vm56 = vcmp.ne.f32.partialorder %v54, %v54
    %v57 = vsel %vm55, 0.0, %v53
    %v58 = vsel %vm56, 0.0, %v54
    %59 = vst [vmem:[#allocation7] sm:$0xff] %v57
    %60 = vst [vmem:[#allocation7 + $0x8] sm:$0xff] %v58
    // Predicated region
    $region18: #{tpu_custom_call.1} parent=1 // pred_check
      _
    $region19: #{tpu_custom_call.1} parent=1 // pred_check_branch
      %62 = sbr.rel (0) target = $region21
    $region20: #{tpu_custom_call.1} parent=1 // pred_region
      %s64 = ssub.s32 256, 256
      %65 = vsyncadd [#allocation4], %s64
      %s66 = sshll.u32 [#allocation7], 4
      %s67 = int_to_ptr.vmem [resolvable:$true] %s66
      %72 = dma.vmem_to_hbm [thread:$0]  %s67, 256, %s2, [#allocation4], 128, 128, 8
    $region21: #{tpu_custom_call.1} parent=1 // pred_fallthru
      _
    // Predicated region
    $region22: #{tpu_custom_call.1} parent=1 // pred_check
      _
    $region23: #{tpu_custom_call.1} parent=1 // pred_check_branch
      %74 = sbr.rel (0) target = $region25
    $region24: #{tpu_custom_call.1} parent=1 // pred_region
      %75 = dma.done [#allocation4], 256
    $region25: #{tpu_custom_call.1} parent=1 // pred_fallthru
      _
    %76 = vsyncpa [#allocation3], 1
    %77 = vsyncpa [#allocation4], 1
    %78 = vsyncpa [#allocation5], 1

</llo_original>
